<compile_context>
chip_gen: v7x
topology: tpu7x:2x2x1
jax: 0.10.0
libtpu: 0.0.40
codegen_flags: <defaults>
</compile_context>

<pallas_src>
import math
import jax
import jax.numpy as jnp
from jax.experimental import pallas as pl
from jax.experimental.pallas import tpu as pltpu


def _round_up(x, m):
    return ((x + m - 1) // m) * m


def _pick_tf(F4, target):
    """Largest multiple of 128 <= target that divides F4; else largest divisor of F4."""
    target = max(1, min(target, F4))
    t = (target // 128) * 128
    while t >= 128:
        if F4 % t == 0:
            return t
        t -= 128
    t = target
    while t >= 1:
        if F4 % t == 0:
            return t
        t -= 1
    return F4


def _tpu_tile_caps():
    """Returns (tm_target, vmem_cap_bytes) for the local TPU generation."""
    kind = ""
    try:
        kind = jax.devices()[0].device_kind.lower()
    except Exception:
        pass
    phys = None
    try:
        phys = getattr(pltpu.get_tpu_info(), "vmem_capacity_bytes", None)
    except Exception:
        phys = None
    if "v7" in kind or (phys is not None and phys <= (64 << 20)):
        return 512, 56 << 20      # v7x: 64 MiB physical VMEM -> leave headroom
    if "v6" in kind:
        return 1024, 100 << 20    # v6e: 128 MiB physical VMEM, MXU-bound at tm=1024
    if "v5" in kind:
        return 512, 100 << 20     # v5e: 128 MiB physical VMEM
    return 512, 56 << 20          # unknown: conservative, fits every generation


def _vmem_estimate(tm, tf, H, act_bytes, w_bytes):
    """Live-set estimate incl. double-buffered streams, accumulator and f32 intermediates."""
    est = 2 * tm * H * act_bytes          # x tile (double-buffered)
    est += 2 * H * (2 * tf) * w_bytes     # fused up|gate weight chunk
    est += 2 * (2 * tf) * 4               # fused bias chunk
    est += 2 * tf * H * w_bytes           # down-proj weight chunk
    est += H * 4                          # b_down
    est += 2 * tm * H * act_bytes         # output tile
    est += tm * H * 4                     # f32 output accumulator
    est += tm * (2 * tf) * 4              # f32 up|gate intermediate
    est += 3 * tm * tf * 4                # gelu temporaries
    est += tm * tf * w_bytes              # gated intermediate cast for MXU
    return est


def _geglu_kernel(x_ref, wug_ref, bug_ref, wd_ref, bd_ref, o_ref, acc_ref):
    # grid = (token tiles, F4 chunks); F4 chunk axis is the reduction ("arbitrary") axis.
    f = pl.program_id(1)
    tf = wd_ref.shape[0]                    # static F4 chunk size

    x = x_ref[...]                          # (tm, H) in the compute dtype
    # Fused up+gate projection for this F4 chunk: (tm, 2*tf), f32 accumulation on the MXU.
    ug = jnp.dot(x, wug_ref[...], preferred_element_type=jnp.float32) + bug_ref[...]
    up = ug[:, :tf]
    gate = ug[:, tf:]

    # Exact (erf-based) GELU in f32 — matches torch.nn.functional.gelu default.
    gelu_gate = 0.5 * gate * (1.0 + jax.lax.erf(gate * (1.0 / math.sqrt(2.0))))

    # Down-projection of this chunk.
    h = (up * gelu_gate).astype(wd_ref.dtype)
    d = jnp.dot(h, wd_ref[...], preferred_element_type=jnp.float32)

    # First reduction step writes directly (no zero-fill + RMW), later steps accumulate.
    @pl.when(f == 0)
    def _first():
        acc_ref[...] = d

    @pl.when(f != 0)
    def _accum():
        acc_ref[...] += d

    @pl.when(f == pl.num_programs(1) - 1)
    def _finalize():
        o_ref[...] = (acc_ref[...] + bd_ref[...]).astype(o_ref.dtype)


def pack_geglu_params(w_up, b_up, w_gate, b_gate, w_down, b_down, *,
                      tf=512, compute_dtype=None):
    """One-time (parameter-load-time) repack. w_up/w_gate: [H, 4H], w_down: [4H, H]."""
    H, F4 = w_up.shape
    tf = _pick_tf(F4, tf)
    nF = F4 // tf
    wdt = compute_dtype if compute_dtype is not None else w_up.dtype

    # Fuse + chunk the up/gate weights: [nF, H, 2*tf] (chunk f: [:, :tf]=up, [:, tf:]=gate).
    w_up_c = w_up.reshape(H, nF, tf).transpose(1, 0, 2)
    w_gate_c = w_gate.reshape(H, nF, tf).transpose(1, 0, 2)
    w_ug = jnp.concatenate([w_up_c, w_gate_c], axis=-1).astype(wdt)          # [nF, H, 2*tf]
    b_ug = jnp.concatenate([b_up.reshape(nF, 1, tf),
                            b_gate.reshape(nF, 1, tf)], axis=-1).astype(jnp.float32)
    w_dn = w_down.reshape(nF, tf, H).astype(wdt)                             # [nF, tf, H]
    b_dn = b_down.reshape(1, H).astype(jnp.float32)
    return dict(w_ug=w_ug, b_ug=b_ug, w_dn=w_dn, b_dn=b_dn, tf=tf, nF=nF, H=H, F4=F4)


def geglu_pallas_packed(x, packed, *, tm=None):
    """Hot path: x [B, S, H], packed = pack_geglu_params(...)."""
    B, S, H = x.shape
    assert H == packed["H"]
    tf, nF = packed["tf"], packed["nF"]
    M = B * S

    wdt = packed["w_ug"].dtype
    x2 = x.reshape(M, H).astype(wdt)     # MXU operands in the compute dtype

    itemsize = jnp.dtype(wdt).itemsize
    sublane = 16 if itemsize == 2 else 8

    tm_target, vmem_cap = _tpu_tile_caps()
    if tm is not None:
        tm_target = tm
    tm = max(sublane, min(tm_target, _round_up(M, sublane)))
    tm = _round_up(tm, sublane)
    # Shrink the token tile until the live set (incl. intermediates) fits the VMEM budget.
    while tm > sublane and _vmem_estimate(tm, tf, H, itemsize, itemsize) > vmem_cap:
        tm = _round_up(max(tm // 2, sublane), sublane)

    est = _vmem_estimate(tm, tf, H, itemsize, itemsize)
    vmem_limit = int(min(max(int(1.25 * est) + (4 << 20), 32 << 20), vmem_cap))

    grid = (pl.cdiv(M, tm), nF)

    out2 = pl.pallas_call(
        _geglu_kernel,
        out_shape=jax.ShapeDtypeStruct((M, H), x.dtype),
        grid=grid,
        in_specs=[
            pl.BlockSpec((tm, H), lambda i, f: (i, 0)),                 # x tile (resident over f)
            pl.BlockSpec((None, H, 2 * tf), lambda i, f: (f, 0, 0)),    # fused W_up|W_gate chunk
            pl.BlockSpec((None, 1, 2 * tf), lambda i, f: (f, 0, 0)),    # fused b_up|b_gate chunk
            pl.BlockSpec((None, tf, H), lambda i, f: (f, 0, 0)),        # W_down chunk
            pl.BlockSpec((1, H), lambda i, f: (0, 0)),                  # b_down
        ],
        out_specs=pl.BlockSpec((tm, H), lambda i, f: (i, 0)),
        scratch_shapes=[pltpu.VMEM((tm, H), jnp.float32)],              # f32 output accumulator
        compiler_params=pltpu.CompilerParams(
            dimension_semantics=("parallel", "arbitrary"),
            vmem_limit_bytes=vmem_limit,
        ),
    )(x2, packed["w_ug"], packed["b_ug"], packed["w_dn"], packed["b_dn"])
    return out2.reshape(B, S, H)


def geglu_pallas(x, w_up, b_up, w_gate, b_gate, w_down, b_down, *,
                 tm=None, tf=512, compute_dtype=None):
    """Convenience wrapper (packs every call). Prefer pack_geglu_params + geglu_pallas_packed."""
    packed = pack_geglu_params(w_up, b_up, w_gate, b_gate, w_down, b_down,
                               tf=tf, compute_dtype=compute_dtype)
    return geglu_pallas_packed(x, packed, tm=tm)


def geglu_ref(x, w_up, b_up, w_gate, b_gate, w_down, b_down):
    up = x @ w_up + b_up
    gate = x @ w_gate + b_gate
    g = 0.5 * gate * (1.0 + jax.lax.erf(gate / jnp.sqrt(2.0)))
    return (up * g) @ w_down + b_down


if __name__ == "__main__":
    # DecoderConfig(hidden_size=32, ...) ; small synthetic shapes.
    hidden = 32
    inner = hidden * 4
    batch, seq = 2, 8

    key = jax.random.PRNGKey(0)
    kx, k1, k2, k3, k4, k5, k6 = jax.random.split(key, 7)

    x = jax.random.normal(kx, (batch, seq, hidden), dtype=jnp.float32)

    # Deterministic param init (Linear weight shape (out,in) in torch; stored here as (in,out)).
    def init_linear(kw, kb, fan_in, fan_out):
        bound = 1.0 / math.sqrt(fan_in)
        w = jax.random.uniform(kw, (fan_in, fan_out), minval=-bound, maxval=bound,
                               dtype=jnp.float32)
        b = jax.random.uniform(kb, (fan_out,), minval=-bound, maxval=bound,
                               dtype=jnp.float32)
        return w, b

    w_up, b_up = init_linear(k1, k2, hidden, inner)
    w_gate, b_gate = init_linear(k3, k4, hidden, inner)
    w_down, b_down = init_linear(k5, k6, inner, hidden)

    # Pack once (hoisted out of the per-call path), then run the hot-path kernel.
    packed = jax.tree_util.tree_map(jax.block_until_ready,
                                    pack_geglu_params(w_up, b_up, w_gate, b_gate,
                                                      w_down, b_down))
    out = geglu_pallas_packed(x, packed)
    out = jax.block_until_ready(out)

    ref = geglu_ref(x, w_up, b_up, w_gate, b_gate, w_down, b_down)
    assert out.shape == (batch, seq, hidden)
    assert jnp.allclose(out, ref, atol=1e-5, rtol=1e-5), "mismatch vs reference"

    print("KERNEL_OK")
</pallas_src>

<mosaic_0001>
module attributes {stable_mosaic.version = 11 : i64} {
  func.func @_geglu_kernel(%arg0: i32, %arg1: i32, %arg2: memref<16x32xf32, #tpu.memory_space<vmem>>, %arg3: memref<1x32x256xf32, #tpu.memory_space<vmem>>, %arg4: memref<1x1x256xf32, #tpu.memory_space<vmem>>, %arg5: memref<1x128x32xf32, #tpu.memory_space<vmem>>, %arg6: memref<1x32xf32, #tpu.memory_space<vmem>>, %arg7: memref<16x32xf32, #tpu.memory_space<vmem>>, %arg8: memref<16x32xf32, #tpu.memory_space<vmem>>) attributes {dimension_semantics = [#tpu.dimension_semantics<parallel>, #tpu.dimension_semantics<arbitrary>], iteration_bounds = array<i64: 1, 1>, scalar_prefetch = 0 : i64, scratch_operands = 1 : i64, tpu.core_type = #tpu.core_type<tc>, window_params = [{transform_indices = @transform_0, window_bounds = array<i64: 16, 32>}, {transform_indices = @transform_1, window_bounds = array<i64: 1, 32, 256>}, {transform_indices = @transform_2, window_bounds = array<i64: 1, 1, 256>}, {transform_indices = @transform_3, window_bounds = array<i64: 1, 128, 32>}, {pipeline_mode = #tpu.pipeline_mode<synchronous>, transform_indices = @transform_4, window_bounds = array<i64: 1, 32>}, {transform_indices = @transform_5, window_bounds = array<i64: 16, 32>}]} {
    %c0 = arith.constant 0 : index
    %c0_0 = arith.constant 0 : index
    %0 = vector.load %arg2[%c0, %c0_0] : memref<16x32xf32, #tpu.memory_space<vmem>>, vector<16x32xf32>
    %c0_1 = arith.constant 0 : index
    %c0_2 = arith.constant 0 : index
    %c0_3 = arith.constant 0 : index
    %1 = vector.load %arg3[%c0_1, %c0_2, %c0_3] : memref<1x32x256xf32, #tpu.memory_space<vmem>>, vector<1x32x256xf32>
    %2 = vector.shape_cast %1 : vector<1x32x256xf32> to vector<32x256xf32>
    %cst = arith.constant dense<0.000000e+00> : vector<16x256xf32>
    %3 = tpu.matmul %0, %2, %cst {dimension_numbers = #tpu.dot_dimension_numbers<[1], [0], [0], [1], [0, 0, 1, 1], [], []>} : vector<16x32xf32>, vector<32x256xf32>, vector<16x256xf32> -> vector<16x256xf32>
    %c0_4 = arith.constant 0 : index
    %c0_5 = arith.constant 0 : index
    %c0_6 = arith.constant 0 : index
    %4 = vector.load %arg4[%c0_4, %c0_5, %c0_6] : memref<1x1x256xf32, #tpu.memory_space<vmem>>, vector<1x1x256xf32>
    %5 = vector.shape_cast %4 : vector<1x1x256xf32> to vector<1x256xf32>
    %6 = vector.broadcast %5 : vector<1x256xf32> to vector<16x256xf32>
    %7 = arith.addf %3, %6 : vector<16x256xf32>
    %8 = vector.extract_strided_slice %7 {offsets = [0, 0], sizes = [16, 128], strides = [1, 1]} : vector<16x256xf32> to vector<16x128xf32>
    %9 = vector.extract_strided_slice %7 {offsets = [0, 128], sizes = [16, 128], strides = [1, 1]} : vector<16x256xf32> to vector<16x128xf32>
    %cst_7 = arith.constant 5.000000e-01 : f32
    %10 = vector.broadcast %cst_7 : f32 to vector<16x128xf32>
    %11 = arith.mulf %10, %9 : vector<16x128xf32>
    %cst_8 = arith.constant 0.707106769 : f32
    %12 = vector.broadcast %cst_8 : f32 to vector<16x128xf32>
    %13 = arith.mulf %9, %12 : vector<16x128xf32>
    %14 = math.erf %13 : vector<16x128xf32>
    %cst_9 = arith.constant 1.000000e+00 : f32
    %15 = vector.broadcast %cst_9 : f32 to vector<16x128xf32>
    %16 = arith.addf %15, %14 : vector<16x128xf32>
    %17 = arith.mulf %11, %16 : vector<16x128xf32>
    %18 = arith.mulf %8, %17 : vector<16x128xf32>
    %c0_10 = arith.constant 0 : index
    %c0_11 = arith.constant 0 : index
    %c0_12 = arith.constant 0 : index
    %19 = vector.load %arg5[%c0_10, %c0_11, %c0_12] : memref<1x128x32xf32, #tpu.memory_space<vmem>>, vector<1x128x32xf32>
    %20 = vector.shape_cast %19 : vector<1x128x32xf32> to vector<128x32xf32>
    %cst_13 = arith.constant dense<0.000000e+00> : vector<16x32xf32>
    %21 = tpu.matmul %18, %20, %cst_13 {dimension_numbers = #tpu.dot_dimension_numbers<[1], [0], [0], [1], [0, 0, 1, 1], [], []>} : vector<16x128xf32>, vector<128x32xf32>, vector<16x32xf32> -> vector<16x32xf32>
    %c0_i32 = arith.constant 0 : i32
    %22 = arith.cmpi eq, %arg1, %c0_i32 : i32
    %23 = arith.extui %22 : i1 to i32
    %c0_i32_14 = arith.constant 0 : i32
    %24 = arith.cmpi ne, %23, %c0_i32_14 : i32
    scf.if %24 {
      %c0_19 = arith.constant 0 : index
      %c0_20 = arith.constant 0 : index
      %31 = vector.load %arg8[%c0_19, %c0_20] : memref<16x32xf32, #tpu.memory_space<vmem>>, vector<16x32xf32>
      tpu.vector_store %arg8[%c0_19, %c0_20], %21 {strides = array<i32>} : memref<16x32xf32, #tpu.memory_space<vmem>>, vector<16x32xf32>,
    } else {
    }
    %c0_i32_15 = arith.constant 0 : i32
    %25 = arith.cmpi ne, %arg1, %c0_i32_15 : i32
    %26 = arith.extui %25 : i1 to i32
    %c0_i32_16 = arith.constant 0 : i32
    %27 = arith.cmpi ne, %26, %c0_i32_16 : i32
    scf.if %27 {
      %c0_19 = arith.constant 0 : index
      %c0_20 = arith.constant 0 : index
      %31 = vector.load %arg8[%c0_19, %c0_20] : memref<16x32xf32, #tpu.memory_space<vmem>>, vector<16x32xf32>
      %32 = arith.addf %31, %21 : vector<16x32xf32>
      %c0_21 = arith.constant 0 : index
      %c0_22 = arith.constant 0 : index
      %33 = vector.load %arg8[%c0_21, %c0_22] : memref<16x32xf32, #tpu.memory_space<vmem>>, vector<16x32xf32>
      tpu.vector_store %arg8[%c0_21, %c0_22], %32 {strides = array<i32>} : memref<16x32xf32, #tpu.memory_space<vmem>>, vector<16x32xf32>,
    } else {
    }
    %c0_i32_17 = arith.constant 0 : i32
    %28 = arith.cmpi eq, %arg1, %c0_i32_17 : i32
    %29 = arith.extui %28 : i1 to i32
    %c0_i32_18 = arith.constant 0 : i32
    %30 = arith.cmpi ne, %29, %c0_i32_18 : i32
    scf.if %30 {
      %c0_19 = arith.constant 0 : index
      %c0_20 = arith.constant 0 : index
      %31 = vector.load %arg8[%c0_19, %c0_20] : memref<16x32xf32, #tpu.memory_space<vmem>>, vector<16x32xf32>
      %c0_21 = arith.constant 0 : index
      %c0_22 = arith.constant 0 : index
      %32 = vector.load %arg6[%c0_21, %c0_22] : memref<1x32xf32, #tpu.memory_space<vmem>>, vector<1x32xf32>
      %33 = vector.broadcast %32 : vector<1x32xf32> to vector<16x32xf32>
      %34 = arith.addf %31, %33 : vector<16x32xf32>
      %c0_23 = arith.constant 0 : index
      %c0_24 = arith.constant 0 : index
      %35 = vector.load %arg7[%c0_23, %c0_24] : memref<16x32xf32, #tpu.memory_space<vmem>>, vector<16x32xf32>
      tpu.vector_store %arg7[%c0_23, %c0_24], %34 {strides = array<i32>} : memref<16x32xf32, #tpu.memory_space<vmem>>, vector<16x32xf32>,
    } else {
    }
    return
  }
  func.func @transform_0(%arg0: i32, %arg1: i32) -> (i32, i32) {
    %c0_i32 = arith.constant 0 : i32
    %c0_i32_0 = arith.constant 0 : i32
    return %arg0, %c0_i32 : i32, i32
  }
  func.func @transform_1(%arg0: i32, %arg1: i32) -> (i32, i32, i32) {
    %c0_i32 = arith.constant 0 : i32
    %c0_i32_0 = arith.constant 0 : i32
    %c0_i32_1 = arith.constant 0 : i32
    return %arg1, %c0_i32, %c0_i32_0 : i32, i32, i32
  }
  func.func @transform_2(%arg0: i32, %arg1: i32) -> (i32, i32, i32) {
    %c0_i32 = arith.constant 0 : i32
    %c0_i32_0 = arith.constant 0 : i32
    %c0_i32_1 = arith.constant 0 : i32
    return %arg1, %c0_i32, %c0_i32_0 : i32, i32, i32
  }
  func.func @transform_3(%arg0: i32, %arg1: i32) -> (i32, i32, i32) {
    %c0_i32 = arith.constant 0 : i32
    %c0_i32_0 = arith.constant 0 : i32
    %c0_i32_1 = arith.constant 0 : i32
    return %arg1, %c0_i32, %c0_i32_0 : i32, i32, i32
  }
  func.func @transform_4(%arg0: i32, %arg1: i32) -> (i32, i32) {
    %c0_i32 = arith.constant 0 : i32
    %c0_i32_0 = arith.constant 0 : i32
    %c0_i32_1 = arith.constant 0 : i32
    return %c0_i32, %c0_i32_0 : i32, i32
  }
  func.func @transform_5(%arg0: i32, %arg1: i32) -> (i32, i32) {
    %c0_i32 = arith.constant 0 : i32
    %c0_i32_0 = arith.constant 0 : i32
    return %arg0, %c0_i32 : i32, i32
  }
}

</mosaic_0001>

<llo_original>
// kernel: tpu_custom_call.1
$region0: #{tpu_custom_call.1}
  #allocation0 [shape = 'u32[]', space=smem, size = 0x4, offset = 0x4, fixed_abs, tag = 'smem constant byte address 0x4 - core index']
  #allocation1 [shape = 'u32[144,128]{1,0:T(1,128)}', space=vmem, size = 0x12000, scoped, tag = 'internal scratch']
  #allocation2 [shape = 'f32[16,32]{1,0:T(8,128)}', space=vmem, size = 0x2000, scoped, tag = 'scratch operand']
  %s0 = inlined_call_operand.vmem [shape: f32[16,32], index: 0, kind: input, shape index: {}]
  %s1 = inlined_call_operand.vmem [shape: f32[1,32,256], index: 1, kind: input, shape index: {}]
  %s2 = inlined_call_operand.vmem [shape: f32[1,1,256], index: 2, kind: input, shape index: {}]
  %s3 = inlined_call_operand.vmem [shape: f32[1,128,32], index: 3, kind: input, shape index: {}]
  %s4 = inlined_call_operand.vmem [shape: f32[1,32], index: 4, kind: input, shape index: {}]
  %s5 = inlined_call_operand.hbm [shape: f32[16,32], index: 5, kind: output, shape index: {}]
  %s6 = sld [smem:[#allocation0]]
  $region42: #{tpu_custom_call.1} parent=0
    _
  %s8 = ssub.s32 1, %s6
  %s9 = scalar_select 0, %s8, %s6
  $region1: #{tpu_custom_call.1} parent=0
    #allocation3 [shape = 'u8[8192]{0}', space=vmem, size = 0x2000, scoped, tag = 'output window, operand 0, single buffered']
    #allocation4 [shape = 's32[1]{0}', space=sflag, size = 0x4, scoped, tag = 'scoped memory for tpu_custom_call.1']
    %10 = vsyncpa [#allocation4], 0
    // Predicated region
    $region2: #{tpu_custom_call.1} parent=1 // pred_check
      _
    $region3: #{tpu_custom_call.1} parent=1 // pred_check_branch
      %12 = sbr.rel (0) target = $region5
    $region4: #{tpu_custom_call.1} parent=1 // pred_region
      _
    $region5: #{tpu_custom_call.1} parent=1 // pred_fallthru
      _
    // Predicated region
    $region6: #{tpu_custom_call.1} parent=1 // pred_check
      _
    $region7: #{tpu_custom_call.1} parent=1 // pred_check_branch
      %14 = sbr.rel (0) target = $region9
    $region8: #{tpu_custom_call.1} parent=1 // pred_region
      _
    $region9: #{tpu_custom_call.1} parent=1 // pred_fallthru
      _
    // Predicated region
    $region10: #{tpu_custom_call.1} parent=1 // pred_check
      _
    $region11: #{tpu_custom_call.1} parent=1 // pred_check_branch
      %16 = sbr.rel (0) target = $region13
    $region12: #{tpu_custom_call.1} parent=1 // pred_region
      _
    $region13: #{tpu_custom_call.1} parent=1 // pred_fallthru
      _
    // Predicated region
    $region14: #{tpu_custom_call.1} parent=1 // pred_check
      _
    $region15: #{tpu_custom_call.1} parent=1 // pred_check_branch
      %18 = sbr.rel (0) target = $region17
    $region16: #{tpu_custom_call.1} parent=1 // pred_region
      _
    $region17: #{tpu_custom_call.1} parent=1 // pred_fallthru
      _
    // Predicated region
    $region18: #{tpu_custom_call.1} parent=1 // pred_check
      _
    $region19: #{tpu_custom_call.1} parent=1 // pred_check_branch
      %20 = sbr.rel (0) target = $region21
    $region20: #{tpu_custom_call.1} parent=1 // pred_region
      _
    $region21: #{tpu_custom_call.1} parent=1 // pred_fallthru
      _
    %v21 = vld [vmem:[%s0] sm:$0xff]
    %v22 = vld [vmem:[%s0 + $0x8] sm:$0xff]
    %v23 = vld [vmem:[%s1] sm:$0xff]
    %v24 = vld [vmem:[%s1 + $0x8] sm:$0xff]
    %v25 = vld [vmem:[%s1 + $0x10] sm:$0xff]
    %v26 = vld [vmem:[%s1 + $0x18] sm:$0xff]
    %v27 = vld [vmem:[%s1 + $0x20] sm:$0xff]
    %v28 = vld [vmem:[%s1 + $0x28] sm:$0xff]
    %v29 = vld [vmem:[%s1 + $0x30] sm:$0xff]
    %v30 = vld [vmem:[%s1 + $0x38] sm:$0xff]
    %v31 = vld [vmem:[%s2] sm:$0x3]
    %v33 = vlaneseq
    %v34 = vshrl.u32 %v33, 7
    %v35 = vsub.s32 0, %v34
    %v36 = vrot.slane %v31, %v35
    %v37 = vlaneseq
    %v38 = vshrl.u32 %v37, 7
    %v39 = vsub.s32 1, %v38
    %v40 = vrot.slane %v31, %v39
    %vm43 = vcmask 261120
    %v45 = vsel %vm43, %v21, 0
    %v48 = vsel %vm43, %v22, 0
    %50 = vmatprep.subr.mxu0 %v24
    %51 = vmatpush1.msra.mxu0 %v23
    %52 = vmatprep.subr.mxu0 %v26
    %53 = vmatpush1.msra.mxu0 %v25
    %54 = vmatprep.subr.mxu0 %v28
    %55 = vmatpush1.msra.mxu0 %v27
    %56 = vmatprep.subr.mxu0 %v30
    %57 = vmatpush1.msra.mxu0 %v29
    %58 = vmatprep.subr.mxu0 0.0
    %59 = vmatpush1.msra.mxu0 0.0
    %60 = vmatprep.subr.mxu0 0.0
    %61 = vmatpush1.msra.mxu0 0.0
    %62 = vmatprep.subr.mxu0 0.0
    %63 = vmatpush1.msra.mxu0 0.0
    %64 = vmatprep.subr.mxu0 0.0
    %65 = vmatpush1.msra.mxu0 0.0
    %66 = vmatprep.subr.mxu0 0.0
    %67 = vmatpush1.msra.mxu0 0.0
    %68 = vmatprep.subr.mxu0 0.0
    %69 = vmatpush1.msra.mxu0 0.0
    %70 = vmatprep.subr.mxu0 0.0
    %71 = vmatpush1.msra.mxu0 0.0
    %72 = vmatprep.subr.mxu0 0.0
    %73 = vmatpush1.msra.mxu0 0.0
    %74 = vmatprep.subr.mxu0 0.0
    %75 = vmatpush1.msra.mxu0 0.0
    %76 = vmatprep.subr.mxu0 0.0
    %77 = vmatpush1.msra.mxu0 0.0
    %78 = vmatprep.subr.mxu0 0.0
    %79 = vmatpush1.msra.mxu0 0.0
    %80 = vmatprep.subr.mxu0 0.0
    %81 = vmatpush1.msra.mxu0 0.0
    %82 = vmatprep.subr.mxu0 0.0
    %83 = vmatpush1.msra.mxu0 0.0
    %84 = vmatprep.subr.mxu0 0.0
    %85 = vmatpush1.msra.mxu0 0.0
    %86 = vmatprep.subr.mxu0 0.0
    %87 = vmatpush1.msra.mxu0 0.0
    %88 = vmatprep.subr.mxu0 0.0
    %89 = vmatpush1.msra.mxu0 0.0
    %90 = vmatprep.subr.mxu0 0.0
    %91 = vmatpush1.msra.mxu0 0.0
    %92 = vmatprep.subr.mxu0 0.0
    %93 = vmatpush1.msra.mxu0 0.0
    %94 = vmatprep.subr.mxu0 0.0
    %95 = vmatpush1.msra.mxu0 0.0
    %96 = vmatprep.subr.mxu0 0.0
    %97 = vmatpush1.msra.mxu0 0.0
    %98 = vmatprep.subr.mxu0 0.0
    %99 = vmatpush1.msra.mxu0 0.0
    %100 = vmatprep.subr.mxu0 0.0
    %101 = vmatpush1.msra.mxu0 0.0
    %102 = vmatprep.subr.mxu0 0.0
    %103 = vmatpush1.msra.mxu0 0.0
    %104 = vmatprep.subr.mxu0 0.0
    %105 = vmatpush1.msra.mxu0 0.0
    %106 = vmatprep.subr.mxu0 0.0
    %107 = vmatpush1.msra.mxu0 0.0
    %108 = vmatprep.subr.mxu0 0.0
    %109 = vmatpush1.msra.mxu0 0.0
    %110 = vmatprep.subr.mxu0 0.0
    %111 = vmatpush1.msra.mxu0 0.0
    %112 = vmatprep.subr.mxu0 0.0
    %113 = vmatpush1.msra.mxu0 0.0
    %114 = vmatprep.mubr.f32.mxu0 0.0
    %115 = vmatmul.mubr.f32.gmra.mrb[0].mxu0 %v45
    %v116 = vpop.f32.mrb[0].mxu0
    %v117 = vadd.f32 %v36, %v116
    %v118 = vpop.f32.mrb[0].mxu0
    %v119 = vadd.f32 %v40, %v118
    %120 = vmatprep.mubr.f32.mxu0 0.0
    %121 = vmatmul.mubr.f32.gmra.mrb[0].mxu0 %v48
    %v122 = vpop.f32.mrb[0].mxu0
    %v123 = vadd.f32 %v36, %v122
    %v124 = vpop.f32.mrb[0].mxu0
    %v125 = vadd.f32 %v40, %v124
    %126 = vdwg.mxu0
    %v127 = vmul.f32 %v119, 0.5
    %v128 = vmul.f32 %v125, 0.5
    %v129 = vmul.f32 %v119, 0.70710677
    %v130 = vmul.f32 %v125, 0.70710677
    %v131 = verf.f32.pop %v129
    %v132 = verf.f32.pop %v130
    %v133 = vadd.f32 %v131, 1.0
    %v134 = vadd.f32 %v132, 1.0
    %v135 = vmul.f32 %v127, %v133
    %v136 = vmul.f32 %v128, %v134
    %v137 = vmul.f32 %v117, %v135
    %v138 = vmul.f32 %v123, %v136
    %v139 = vld [vmem:[%s3] sm:$0xff]
    %v140 = vld [vmem:[%s3 + $0x8] sm:$0xff]
    %v141 = vld [vmem:[%s3 + $0x10] sm:$0xff]
    %v142 = vld [vmem:[%s3 + $0x18] sm:$0xff]
    %v143 = vld [vmem:[%s3 + $0x20] sm:$0xff]
    %v144 = vld [vmem:[%s3 + $0x28] sm:$0xff]
    %v145 = vld [vmem:[%s3 + $0x30] sm:$0xff]
    %v146 = vld [vmem:[%s3 + $0x38] sm:$0xff]
    %v147 = vld [vmem:[%s3 + $0x40] sm:$0xff]
    %v148 = vld [vmem:[%s3 + $0x48] sm:$0xff]
    %v149 = vld [vmem:[%s3 + $0x50] sm:$0xff]
    %v150 = vld [vmem:[%s3 + $0x58] sm:$0xff]
    %v151 = vld [vmem:[%s3 + $0x60] sm:$0xff]
    %v152 = vld [vmem:[%s3 + $0x68] sm:$0xff]
    %v153 = vld [vmem:[%s3 + $0x70] sm:$0xff]
    %v154 = vld [vmem:[%s3 + $0x78] sm:$0xff]
    %155 = vmatprep.subr.mxu0 0.0
    %156 = vmatpush1.msra.mxu0 %v139
    %157 = vmatprep.subr.mxu0 0.0
    %158 = vmatpush1.msra.mxu0 %v140
    %159 = vmatprep.subr.mxu0 0.0
    %160 = vmatpush1.msra.mxu0 %v141
    %161 = vmatprep.subr.mxu0 0.0
    %162 = vmatpush1.msra.mxu0 %v142
    %163 = vmatprep.subr.mxu0 0.0
    %164 = vmatpush1.msra.mxu0 %v143
    %165 = vmatprep.subr.mxu0 0.0
    %166 = vmatpush1.msra.mxu0 %v144
    %167 = vmatprep.subr.mxu0 0.0
    %168 = vmatpush1.msra.mxu0 %v145
    %169 = vmatprep.subr.mxu0 0.0
    %170 = vmatpush1.msra.mxu0 %v146
    %171 = vmatprep.subr.mxu0 0.0
    %172 = vmatpush1.msra.mxu0 %v147
    %173 = vmatprep.subr.mxu0 0.0
    %174 = vmatpush1.msra.mxu0 %v148
    %175 = vmatprep.subr.mxu0 0.0
    %176 = vmatpush1.msra.mxu0 %v149
    %177 = vmatprep.subr.mxu0 0.0
    %178 = vmatpush1.msra.mxu0 %v150
    %179 = vmatprep.subr.mxu0 0.0
    %180 = vmatpush1.msra.mxu0 %v151
    %181 = vmatprep.subr.mxu0 0.0
    %182 = vmatpush1.msra.mxu0 %v152
    %183 = vmatprep.subr.mxu0 0.0
    %184 = vmatpush1.msra.mxu0 %v153
    %185 = vmatprep.subr.mxu0 0.0
    %186 = vmatpush1.msra.mxu0 %v154
    %187 = vmatprep.subr.mxu0 0.0
    %188 = vmatpush1.msra.mxu0 0.0
    %189 = vmatprep.subr.mxu0 0.0
    %190 = vmatpush1.msra.mxu0 0.0
    %191 = vmatprep.subr.mxu0 0.0
    %192 = vmatpush1.msra.mxu0 0.0
    %193 = vmatprep.subr.mxu0 0.0
    %194 = vmatpush1.msra.mxu0 0.0
    %195 = vmatprep.subr.mxu0 0.0
    %196 = vmatpush1.msra.mxu0 0.0
    %197 = vmatprep.subr.mxu0 0.0
    %198 = vmatpush1.msra.mxu0 0.0
    %199 = vmatprep.subr.mxu0 0.0
    %200 = vmatpush1.msra.mxu0 0.0
    %201 = vmatprep.subr.mxu0 0.0
    %202 = vmatpush1.msra.mxu0 0.0
    %203 = vmatprep.subr.mxu0 0.0
    %204 = vmatpush1.msra.mxu0 0.0
    %205 = vmatprep.subr.mxu0 0.0
    %206 = vmatpush1.msra.mxu0 0.0
    %207 = vmatprep.subr.mxu0 0.0
    %208 = vmatpush1.msra.mxu0 0.0
    %209 = vmatprep.subr.mxu0 0.0
    %210 = vmatpush1.msra.mxu0 0.0
    %211 = vmatprep.subr.mxu0 0.0
    %212 = vmatpush1.msra.mxu0 0.0
    %213 = vmatprep.subr.mxu0 0.0
    %214 = vmatpush1.msra.mxu0 0.0
    %215 = vmatprep.subr.mxu0 0.0
    %216 = vmatpush1.msra.mxu0 0.0
    %217 = vmatprep.subr.mxu0 0.0
    %218 = vmatpush1.msra.mxu0 0.0
    %219 = vmatprep.mubr.f32.mxu0 0.0
    %220 = vmatmul.mubr.f32.gmra.mrb[0].mxu0 %v137
    %v221 = vpop.f32.mrb[0].mxu0
    %v222 = vadd.f32 0.0, %v221
    %v223 = vpop.f32.mrb[0].mxu0
    %224 = vmatprep.mubr.f32.mxu0 0.0
    %225 = vmatmul.mubr.f32.gmra.mrb[0].mxu0 %v138
    %v226 = vpop.f32.mrb[0].mxu0
    %v227 = vadd.f32 0.0, %v226
    %v228 = vpop.f32.mrb[0].mxu0
    %229 = vdwg.mxu0
    %p230 = scmp.eq.s32.totalorder 0, 0
    // Predicated region
    $region22: #{tpu_custom_call.1} parent=1 // pred_check
      %p231 = pneg %p230
    $region23: #{tpu_custom_call.1} parent=1 // pred_check_branch
      %233 = sbr.rel (%p231) target = $region25
    $region24: #{tpu_custom_call.1} parent=1 // pred_region
      %234 = vst.msk [vmem:[#allocation2] sm:$0xff] %vm43, %v222
      %235 = vst.msk [vmem:[#allocation2 + $0x8] sm:$0xff] %vm43, %v227
    $region25: #{tpu_custom_call.1} parent=1 // pred_fallthru
      _
    %p236 = scmp.ne.s32.totalorder 0, 0
    // Predicated region
    $region26: #{tpu_custom_call.1} parent=1 // pred_check
      %p237 = pneg %p236
    $region27: #{tpu_custom_call.1} parent=1 // pred_check_branch
      %239 = sbr.rel (%p237) target = $region29
    $region28: #{tpu_custom_call.1} parent=1 // pred_region
      %v240 = vld [vmem:[#allocation2] sm:$0xff]
      %v241 = vld [vmem:[#allocation2 + $0x8] sm:$0xff]
      %v242 = vadd.f32 %v240, %v222
      %v243 = vadd.f32 %v241, %v227
      %244 = vst.msk [vmem:[#allocation2] sm:$0xff] %vm43, %v242
      %245 = vst.msk [vmem:[#allocation2 + $0x8] sm:$0xff] %vm43, %v243
    $region29: #{tpu_custom_call.1} parent=1 // pred_fallthru
      _
    // Predicated region
    $region30: #{tpu_custom_call.1} parent=1 // pred_check
      %p246 = pneg %p230
    $region31: #{tpu_custom_call.1} parent=1 // pred_check_branch
      %248 = sbr.rel (%p246) target = $region33
    $region32: #{tpu_custom_call.1} parent=1 // pred_region
      %v249 = vld [vmem:[#allocation2] sm:$0xff]
      %v250 = vld [vmem:[#allocation2 + $0x8] sm:$0xff]
      %v251 = vld [vmem:[%s4] sm:$0x1]
      %v253 = vlaneseq
      %v254 = vshrl.u32 %v253, 7
      %v255 = vsub.s32 0, %v254
      %v256 = vrot.slane %v251, %v255
      %v258 = vadd.f32 %v249, %v256
      %v259 = vadd.f32 %v250, %v256
      %260 = vst.msk [vmem:[#allocation3] sm:$0xff] %vm43, %v258
      %261 = vst.msk [vmem:[#allocation3 + $0x8] sm:$0xff] %vm43, %v259
    $region33: #{tpu_custom_call.1} parent=1 // pred_fallthru
      _
    // Predicated region
    $region34: #{tpu_custom_call.1} parent=1 // pred_check
      _
    $region35: #{tpu_custom_call.1} parent=1 // pred_check_branch
      %263 = sbr.rel (0) target = $region37
    $region36: #{tpu_custom_call.1} parent=1 // pred_region
      %s265 = ssub.s32 256, 256
      %266 = vsyncadd [#allocation4], %s265
      %s267 = sshll.u32 [#allocation3], 4
      %s268 = int_to_ptr.vmem [resolvable:$true] %s267
      %273 = dma.vmem_to_hbm [thread:$0]  %s268, 256, %s5, [#allocation4], 128, 128, 8
    $region37: #{tpu_custom_call.1} parent=1 // pred_fallthru
      _
    // Predicated region
    $region38: #{tpu_custom_call.1} parent=1 // pred_check
      _
    $region39: #{tpu_custom_call.1} parent=1 // pred_check_branch
      %275 = sbr.rel (0) target = $region41
    $region40: #{tpu_custom_call.1} parent=1 // pred_region
      %276 = dma.done [#allocation4], 256
    $region41: #{tpu_custom_call.1} parent=1 // pred_fallthru
      _
    %277 = vsyncpa [#allocation4], 1

</llo_original>
